<compile_context>
chip_gen: v7x
topology: tpu7x:2x2x1
jax: 0.10.0
libtpu: 0.0.40
codegen_flags: <defaults>
</compile_context>

<pallas_src>
import functools

import jax
import jax.numpy as jnp
from jax.experimental import pallas as pl
from jax.experimental.pallas import tpu as pltpu


def _attention_mod_kernel(x_ref, f_ref, out_ref, att_ref, *, inv_c2):
    # x_ref / f_ref / out_ref: (nb, C, TS) tiles; att_ref: (nb, 1, TS).
    x = x_ref[...]
    # f32 accumulation for the channel reduction without an explicit astype on
    # the full (nb, C, TS) tile.
    sum_x = jnp.sum(x, axis=1, dtype=jnp.float32, keepdims=True)            # (nb,1,TS)
    sum_f = jnp.sum(f_ref[...], axis=1, dtype=jnp.float32, keepdims=True)   # (nb,1,TS)
    importance = jax.nn.sigmoid(sum_x * sum_f * inv_c2)                     # f32

    att_ref[...] = importance.astype(att_ref.dtype)
    out_ref[...] = x * importance.astype(x.dtype)                           # input dtype


def _round_up(v, m):
    return -(-v // m) * m


def attention_mod(x, flow_a, *, donate_x=False):
    """x, flow_a: (N, C, D, H, W) arrays. Returns (output, attention).

    output:    (N, C, D, H, W), dtype of x
    attention: (N, 1, D, H, W), dtype of x  (the module's `self.attention`)
    """
    assert x.shape == flow_a.shape and x.dtype == flow_a.dtype
    N, C, D, H, W = x.shape
    S = D * H * W

    x2 = x.reshape(N, C, S)
    f2 = flow_a.reshape(N, C, S)

    itemsize = jnp.dtype(x.dtype).itemsize
    sublane = {4: 8, 2: 16, 1: 32}.get(itemsize, 8)
    c_pad = _round_up(C, sublane)

    # Generation-aware VMEM budgeting: v7x has 64 MiB/TC, v5e/v6e have 128 MiB.
    try:
        vmem_cap = pltpu.get_tpu_info().vmem_capacity_bytes
    except Exception:
        vmem_cap = 128 * 1024 * 1024
    if vmem_cap <= 64 * 1024 * 1024:
        vmem_budget = 24 * 1024 * 1024
        vmem_limit = 40 * 1024 * 1024
    else:
        vmem_budget = 56 * 1024 * 1024
        vmem_limit = 96 * 1024 * 1024

    # Bytes per lane-column per batch element, counting sublane padding of C
    # (x + flow + out) and a full sublane tile for the attention row.
    bytes_per_col = (3 * c_pad + sublane) * itemsize
    # Target a few MiB of traffic per grid step; double-buffered I/O plus the
    # small f32 intermediates must fit comfortably inside the budget.
    target_step_bytes = min(8 * 1024 * 1024, vmem_budget // 4)

    ts = max(128, (target_step_bytes // bytes_per_col) // 128 * 128)
    ts = min(ts, _round_up(S, 128))
    s_tiles = pl.cdiv(S, ts)

    # Small-C / small-S layers: block several batch elements per step so the
    # per-step transfer doesn't fall below the pipeline-overhead knee.
    nb = 1
    step_bytes = bytes_per_col * ts
    if s_tiles == 1 and step_bytes < target_step_bytes:
        nb = min(N, max(1, target_step_bytes // max(step_bytes, 1)))
    # Keep >= 2 grid steps when there is splittable work (v7x megacore).
    if nb > 1 and pl.cdiv(N, nb) * s_tiles < 2 and N * s_tiles >= 2:
        nb = (N + 1) // 2

    grid = (pl.cdiv(N, nb), s_tiles)

    kernel = functools.partial(_attention_mod_kernel, inv_c2=float(1.0 / (C * C)))

    # TODO(synk): if an xprof trace on v7x shows exposed input-DMA waits at
    # small per-step sizes, add pipeline_mode=pl.Buffered(3) to the two input
    # BlockSpecs (headroom exists under the tighter v7x budget).
    out, att = pl.pallas_call(
        kernel,
        out_shape=(
            jax.ShapeDtypeStruct((N, C, S), x.dtype),
            jax.ShapeDtypeStruct((N, 1, S), x.dtype),
        ),
        grid_spec=pltpu.PrefetchScalarGridSpec(
            num_scalar_prefetch=0,
            grid=grid,
            in_specs=[
                pl.BlockSpec((nb, C, ts), lambda i, j: (i, 0, j)),
                pl.BlockSpec((nb, C, ts), lambda i, j: (i, 0, j)),
            ],
            out_specs=[
                pl.BlockSpec((nb, C, ts), lambda i, j: (i, 0, j)),
                pl.BlockSpec((nb, 1, ts), lambda i, j: (i, 0, j)),
            ],
        ),
        compiler_params=pltpu.CompilerParams(
            dimension_semantics=("parallel", "parallel"),
            vmem_limit_bytes=vmem_limit,
        ),
        # Optional: reuse x's HBM buffer for the main output (halves the HBM
        # footprint of the largest activation). Only enable when the caller no
        # longer needs x after this call.
        input_output_aliases=({0: 0} if donate_x else {}),
    )(x2, f2)

    return out.reshape(N, C, D, H, W), att.reshape(N, 1, D, H, W)


def _reference(x, flow_a):
    xf = x.astype(jnp.float32)
    ff = flow_a.astype(jnp.float32)
    attention_f = jnp.mean(ff, axis=1, keepdims=True)
    attention_x = jnp.mean(xf, axis=1, keepdims=True)
    importance_map = jax.nn.sigmoid(attention_x * attention_f)
    return xf * importance_map, importance_map


if __name__ == "__main__":
    key = jax.random.PRNGKey(0)

    # Case 1: small 3D-ResNet-like shape, S multiple of 128.
    kx, kf, key = jax.random.split(key, 3)
    x = jax.random.normal(kx, (2, 4, 4, 8, 8), dtype=jnp.float32)
    flow_a = jax.random.normal(kf, (2, 4, 4, 8, 8), dtype=jnp.float32)
    out, att = attention_mod(x, flow_a)
    out = jax.block_until_ready(out)
    att = jax.block_until_ready(att)
    ref_out, ref_att = _reference(x, flow_a)
    assert jnp.allclose(out, ref_out, atol=1e-5, rtol=1e-5)
    assert jnp.allclose(att, ref_att, atol=1e-5, rtol=1e-5)

    # Case 2: ragged spatial size (S = 3*7*7 = 147) and C not a sublane
    # multiple — exercises the masked last-tile path (no wrapper padding).
    kx2, kf2, key = jax.random.split(key, 3)
    x2 = jax.random.normal(kx2, (2, 3, 3, 7, 7), dtype=jnp.float32)
    f2 = jax.random.normal(kf2, (2, 3, 3, 7, 7), dtype=jnp.float32)
    out2, att2 = attention_mod(x2, f2)
    out2 = jax.block_until_ready(out2)
    att2 = jax.block_until_ready(att2)
    ref_out2, ref_att2 = _reference(x2, f2)
    assert jnp.allclose(out2, ref_out2, atol=1e-5, rtol=1e-5)
    assert jnp.allclose(att2, ref_att2, atol=1e-5, rtol=1e-5)

    # Case 3: bf16 inputs — exercises 16-bit sublane packing and the f32
    # reduction path; looser tolerance for the low-precision dtype.
    kx3, kf3, key = jax.random.split(key, 3)
    x3 = jax.random.normal(kx3, (2, 4, 2, 8, 8), dtype=jnp.bfloat16)
    f3 = jax.random.normal(kf3, (2, 4, 2, 8, 8), dtype=jnp.bfloat16)
    out3, att3 = attention_mod(x3, f3)
    out3 = jax.block_until_ready(out3)
    att3 = jax.block_until_ready(att3)
    ref_out3, ref_att3 = _reference(x3, f3)
    assert jnp.allclose(out3.astype(jnp.float32), ref_out3, atol=5e-2, rtol=5e-2)
    assert jnp.allclose(att3.astype(jnp.float32), ref_att3, atol=5e-2, rtol=5e-2)

    print("KERNEL_OK")
</pallas_src>

<mosaic_0001>
module attributes {stable_mosaic.version = 11 : i64} {
  func.func @_attention_mod_kernel(%arg0: i32, %arg1: i32, %arg2: memref<1x4x256xf32, #tpu.memory_space<vmem>>, %arg3: memref<1x4x256xf32, #tpu.memory_space<vmem>>, %arg4: memref<1x4x256xf32, #tpu.memory_space<vmem>>, %arg5: memref<1x1x256xf32, #tpu.memory_space<vmem>>) attributes {dimension_semantics = [#tpu.dimension_semantics<parallel>, #tpu.dimension_semantics<parallel>], iteration_bounds = array<i64: 2, 1>, scalar_prefetch = 0 : i64, scratch_operands = 0 : i64, tpu.core_type = #tpu.core_type<tc>, window_params = [{transform_indices = @transform_0, window_bounds = array<i64: 1, 4, 256>}, {transform_indices = @transform_1, window_bounds = array<i64: 1, 4, 256>}, {transform_indices = @transform_2, window_bounds = array<i64: 1, 4, 256>}, {transform_indices = @transform_3, window_bounds = array<i64: 1, 1, 256>}]} {
    %c0 = arith.constant 0 : index
    %c0_0 = arith.constant 0 : index
    %c0_1 = arith.constant 0 : index
    %0 = vector.load %arg2[%c0, %c0_0, %c0_1] : memref<1x4x256xf32, #tpu.memory_space<vmem>>, vector<1x4x256xf32>
    %cst = arith.constant dense<0.000000e+00> : vector<1x256xf32>
    %1 = vector.multi_reduction <add>, %0, %cst [1] : vector<1x4x256xf32> to vector<1x256xf32>
    %2 = vector.shape_cast %1 : vector<1x256xf32> to vector<1x1x256xf32>
    %c0_2 = arith.constant 0 : index
    %c0_3 = arith.constant 0 : index
    %c0_4 = arith.constant 0 : index
    %3 = vector.load %arg3[%c0_2, %c0_3, %c0_4] : memref<1x4x256xf32, #tpu.memory_space<vmem>>, vector<1x4x256xf32>
    %cst_5 = arith.constant dense<0.000000e+00> : vector<1x256xf32>
    %4 = vector.multi_reduction <add>, %3, %cst_5 [1] : vector<1x4x256xf32> to vector<1x256xf32>
    %5 = vector.shape_cast %4 : vector<1x256xf32> to vector<1x1x256xf32>
    %6 = arith.mulf %2, %5 : vector<1x1x256xf32>
    %cst_6 = arith.constant 6.250000e-02 : f32
    %7 = vector.broadcast %cst_6 : f32 to vector<1x1x256xf32>
    %8 = arith.mulf %6, %7 : vector<1x1x256xf32>
    %9 = arith.negf %8 : vector<1x1x256xf32>
    %10 = math.exp %9 : vector<1x1x256xf32>
    %cst_7 = arith.constant 1.000000e+00 : f32
    %11 = vector.broadcast %cst_7 : f32 to vector<1x1x256xf32>
    %12 = arith.addf %11, %10 : vector<1x1x256xf32>
    %13 = arith.divf %11, %12 : vector<1x1x256xf32>
    %c0_8 = arith.constant 0 : index
    %c0_9 = arith.constant 0 : index
    %c0_10 = arith.constant 0 : index
    %14 = vector.load %arg5[%c0_8, %c0_9, %c0_10] : memref<1x1x256xf32, #tpu.memory_space<vmem>>, vector<1x1x256xf32>
    tpu.vector_store %arg5[%c0_8, %c0_9, %c0_10], %13 {strides = array<i32>} : memref<1x1x256xf32, #tpu.memory_space<vmem>>, vector<1x1x256xf32>,
    %15 = vector.broadcast %13 : vector<1x1x256xf32> to vector<1x4x256xf32>
    %16 = arith.mulf %0, %15 : vector<1x4x256xf32>
    %c0_11 = arith.constant 0 : index
    %c0_12 = arith.constant 0 : index
    %c0_13 = arith.constant 0 : index
    %17 = vector.load %arg4[%c0_11, %c0_12, %c0_13] : memref<1x4x256xf32, #tpu.memory_space<vmem>>, vector<1x4x256xf32>
    tpu.vector_store %arg4[%c0_11, %c0_12, %c0_13], %16 {strides = array<i32>} : memref<1x4x256xf32, #tpu.memory_space<vmem>>, vector<1x4x256xf32>,
    return
  }
  func.func @transform_0(%arg0: i32, %arg1: i32) -> (i32, i32, i32) {
    %c0_i32 = arith.constant 0 : i32
    %c0_i32_0 = arith.constant 0 : i32
    return %arg0, %c0_i32, %arg1 : i32, i32, i32
  }
  func.func @transform_1(%arg0: i32, %arg1: i32) -> (i32, i32, i32) {
    %c0_i32 = arith.constant 0 : i32
    %c0_i32_0 = arith.constant 0 : i32
    return %arg0, %c0_i32, %arg1 : i32, i32, i32
  }
  func.func @transform_2(%arg0: i32, %arg1: i32) -> (i32, i32, i32) {
    %c0_i32 = arith.constant 0 : i32
    %c0_i32_0 = arith.constant 0 : i32
    return %arg0, %c0_i32, %arg1 : i32, i32, i32
  }
  func.func @transform_3(%arg0: i32, %arg1: i32) -> (i32, i32, i32) {
    %c0_i32 = arith.constant 0 : i32
    %c0_i32_0 = arith.constant 0 : i32
    return %arg0, %c0_i32, %arg1 : i32, i32, i32
  }
}

</mosaic_0001>

<llo_original>
// kernel: tpu_custom_call.1
$region0: #{tpu_custom_call.1}
  #allocation0 [shape = 'u32[]', space=smem, size = 0x4, offset = 0x4, fixed_abs, tag = 'smem constant byte address 0x4 - core index']
  #allocation1 [shape = 'u32[144,128]{1,0:T(1,128)}', space=vmem, size = 0x12000, scoped, tag = 'internal scratch']
  %s0 = inlined_call_operand.hbm [shape: f32[2,4,256], index: 0, kind: input, shape index: {}]
  %s1 = inlined_call_operand.hbm [shape: f32[2,4,256], index: 1, kind: input, shape index: {}]
  %s2 = inlined_call_operand.hbm [shape: f32[2,4,256], index: 2, kind: output, shape index: {0}]
  %s3 = inlined_call_operand.hbm [shape: f32[2,1,256], index: 3, kind: output, shape index: {1}]
  %4 = xla_tuple %s2, %s3
  %s5 = sld [smem:[#allocation0]]
  $region57: #{tpu_custom_call.1} parent=0
    _
  %s7 = ssub.s32 1, %s5
  %s8 = scalar_select 0, %s7, %s5
  $region1: #{tpu_custom_call.1} parent=0
    #allocation2 [shape = 'u8[8192]{0}', space=vmem, size = 0x2000, scoped, tag = 'input window, operand 0']
    #allocation3 [shape = 's32[2]{0}', space=sflag, size = 0x8, scoped, tag = 'scoped memory for tpu_custom_call.1']
    #allocation4 [shape = 's32[2]{0}', space=sflag, size = 0x8, scoped, tag = 'scoped memory for tpu_custom_call.1']
    #allocation5 [shape = 'u8[8192]{0}', space=vmem, size = 0x2000, scoped, tag = 'input window, operand 1']
    #allocation6 [shape = 's32[2]{0}', space=sflag, size = 0x8, scoped, tag = 'scoped memory for tpu_custom_call.1']
    #allocation7 [shape = 'u8[8192]{0}', space=vmem, size = 0x2000, scoped, tag = 'output window, operand 0']
    #allocation8 [shape = 'u8[2048]{0}', space=vmem, size = 0x800, scoped, tag = 'output window, operand 1']
    #allocation9 [shape = 's32[2]{0}', space=sflag, size = 0x8, scoped, tag = 'scoped memory for tpu_custom_call.1']
    %9 = vsyncpa [#allocation3], 0
    %s10 = scalar_lea.sflag [#allocation3], 1
    %11 = vsyncpa %s10, 0
    %12 = vsyncpa [#allocation6], 0
    %s13 = scalar_lea.sflag [#allocation6], 1
    %14 = vsyncpa %s13, 0
    %15 = vsyncpa [#allocation4], 0
    %s16 = scalar_lea.sflag [#allocation4], 1
    %17 = vsyncpa %s16, 0
    %18 = vsyncpa [#allocation9], 0
    %s19 = scalar_lea.sflag [#allocation9], 1
    %20 = vsyncpa %s19, 0
    loop: start=0, step=1, limit=4
    $region2: #{tpu_custom_call.1} parent=1 // loop_pre_header
      _
    $region3: #{tpu_custom_call.1} parent=1 // loop_header
      %s22 = sphi 0, %s26
      %p23 = scmp.ge.s32.totalorder %s22, 4
      %s29 = sphi 0, %s41
      %s30 = sphi 0, %s37
      %s31 = sphi 0, %s29
      %s32 = sphi 0, %s30
      %s33 = sphi 0, %s31
      %s34 = sphi 0, %s32
      %s46 = sphi 0, %s48
      %s49 = sphi 0, %s46
      %s50 = sphi 0, %s49
      %s66 = sphi 0, %s50
      %s74 = sphi 0, %s76
      %s77 = sphi 0, %s74
      %s78 = sphi 0, %s77
      %s94 = sphi 0, %s78
      %s102 = sphi 0, %s104
      %s105 = sphi 0, %s102
      %s106 = sphi 0, %s105
      %s122 = sphi 0, %s106
      %s130 = sphi 0, %s132
      %s133 = sphi 0, %s130
      %s134 = sphi 0, %s133
      %s150 = sphi 0, %s134
    $region4: #{tpu_custom_call.1} parent=1 // loop_header_branch
      %25 = sbr.rel (%p23) target = $region8
    $region5: #{tpu_custom_call.1} parent=1 // loop_body
      %s27 = ssub.s32 %s22, 1
      %s28 = ssub.s32 %s22, 2
      %s35 = sadd.s32 1, %s30
      %p36 = scmp.ge.s32.totalorder %s35, 1
      %s37 = scalar_select %p36, 0, %s35
      %s38 = sadd.s32 1, %s29
      %s39 = scalar_select %p36, %s38, %s29
      %p40 = scmp.ge.s32.totalorder %s39, 2
      %s41 = scalar_select %p40, 0, %s39
      %s42 = ssub.s32 %s29, %s41
      %s43 = ssub.s32 %s30, %s37
      %s44 = sor.u32 %s42, %s43
      %p45 = scmp.eq.s32.totalorder %s44, 0
      %s47 = sadd.s32 %s46, 1
      %s48 = scalar_select %p45, %s46, %s47
      %p51 = pneg %p45
      %p52 = scmp.eq.s32.totalorder %s22, 1
      %p53 = por %p51, %p52
      %p54 = scmp.ne.s32.totalorder %s46, %s49
      %p55 = scmp.eq.s32.totalorder %s22, 0
      %p56 = por %p54, %p55
      %p57 = scmp.ne.s32.totalorder %s46, %s49
      %p58 = scmp.eq.s32.totalorder %s27, 1
      %p59 = por %p57, %p58
      %p60 = scmp.ne.s32.totalorder %s49, %s50
      %p61 = scmp.eq.s32.totalorder %s27, 0
      %p62 = por %p60, %p61
      %p63 = scmp.ne.s32.totalorder %s49, %s50
      %p64 = scmp.eq.s32.totalorder %s28, 1
      %p65 = por %p63, %p64
      %p67 = scmp.ne.s32.totalorder %s50, %s66
      %p68 = scmp.eq.s32.totalorder %s28, 0
      %p69 = por %p67, %p68
      %s70 = ssub.s32 %s29, %s41
      %s71 = ssub.s32 %s30, %s37
      %s72 = sor.u32 %s70, %s71
      %p73 = scmp.eq.s32.totalorder %s72, 0
      %s75 = sadd.s32 %s74, 1
      %s76 = scalar_select %p73, %s74, %s75
      %p79 = pneg %p73
      %p80 = scmp.eq.s32.totalorder %s22, 1
      %p81 = por %p79, %p80
      %p82 = scmp.ne.s32.totalorder %s74, %s77
      %p83 = scmp.eq.s32.totalorder %s22, 0
      %p84 = por %p82, %p83
      %p85 = scmp.ne.s32.totalorder %s74, %s77
      %p86 = scmp.eq.s32.totalorder %s27, 1
      %p87 = por %p85, %p86
      %p88 = scmp.ne.s32.totalorder %s77, %s78
      %p89 = scmp.eq.s32.totalorder %s27, 0
      %p90 = por %p88, %p89
      %p91 = scmp.ne.s32.totalorder %s77, %s78
      %p92 = scmp.eq.s32.totalorder %s28, 1
      %p93 = por %p91, %p92
      %p95 = scmp.ne.s32.totalorder %s78, %s94
      %p96 = scmp.eq.s32.totalorder %s28, 0
      %p97 = por %p95, %p96
      %s98 = ssub.s32 %s29, %s41
      %s99 = ssub.s32 %s30, %s37
      %s100 = sor.u32 %s98, %s99
      %p101 = scmp.eq.s32.totalorder %s100, 0
      %s103 = sadd.s32 %s102, 1
      %s104 = scalar_select %p101, %s102, %s103
      %p107 = pneg %p101
      %p108 = scmp.eq.s32.totalorder %s22, 1
      %p109 = por %p107, %p108
      %p110 = scmp.ne.s32.totalorder %s102, %s105
      %p111 = scmp.eq.s32.totalorder %s22, 0
      %p112 = por %p110, %p111
      %p113 = scmp.ne.s32.totalorder %s102, %s105
      %p114 = scmp.eq.s32.totalorder %s27, 1
      %p115 = por %p113, %p114
      %p116 = scmp.ne.s32.totalorder %s105, %s106
      %p117 = scmp.eq.s32.totalorder %s27, 0
      %p118 = por %p116, %p117
      %p119 = scmp.ne.s32.totalorder %s105, %s106
      %p120 = scmp.eq.s32.totalorder %s28, 1
      %p121 = por %p119, %p120
      %p123 = scmp.ne.s32.totalorder %s106, %s122
      %p124 = scmp.eq.s32.totalorder %s28, 0
      %p125 = por %p123, %p124
      %s126 = ssub.s32 %s29, %s41
      %s127 = ssub.s32 %s30, %s37
      %s128 = sor.u32 %s126, %s127
      %p129 = scmp.eq.s32.totalorder %s128, 0
      %s131 = sadd.s32 %s130, 1
      %s132 = scalar_select %p129, %s130, %s131
      %p135 = pneg %p129
      %p136 = scmp.eq.s32.totalorder %s22, 1
      %p137 = por %p135, %p136
      %p138 = scmp.ne.s32.totalorder %s130, %s133
      %p139 = scmp.eq.s32.totalorder %s22, 0
      %p140 = por %p138, %p139
      %p141 = scmp.ne.s32.totalorder %s130, %s133
      %p142 = scmp.eq.s32.totalorder %s27, 1
      %p143 = por %p141, %p142
      %p144 = scmp.ne.s32.totalorder %s133, %s134
      %p145 = scmp.eq.s32.totalorder %s27, 0
      %p146 = por %p144, %p145
      %p147 = scmp.ne.s32.totalorder %s133, %s134
      %p148 = scmp.eq.s32.totalorder %s28, 1
      %p149 = por %p147, %p148
      %p151 = scmp.ne.s32.totalorder %s134, %s150
      %p152 = scmp.eq.s32.totalorder %s28, 0
      %p153 = por %p151, %p152
      %p154 = scmp.le.s32.totalorder 1, %s22
      %p155 = scmp.lt.s32.totalorder %s22, 3
      %p156 = pnand %p154, %p155
      %p157 = pneg %p156
      // Predicated region
      $region9: #{tpu_custom_call.1} parent=5 // pred_check
        _
      $region10: #{tpu_custom_call.1} parent=5 // pred_check_branch
        %159 = sbr.rel (%p156) target = $region12
      $region11: #{tpu_custom_call.1} parent=5 // pred_region
        %s160 = ssub.s32 %s22, 1
      $region12: #{tpu_custom_call.1} parent=5 // pred_fallthru
        _
      %p161 = scmp.lt.s32.totalorder %s22, 2
      // Predicated region
      $region13: #{tpu_custom_call.1} parent=5 // pred_check
        %p162 = pneg %p161
      $region14: #{tpu_custom_call.1} parent=5 // pred_check_branch
        %164 = sbr.rel (%p162) target = $region16
      $region15: #{tpu_custom_call.1} parent=5 // pred_region
        // Predicated region
        $region17: #{tpu_custom_call.1} parent=15 // pred_check
          %p165 = pneg %p56
        $region18: #{tpu_custom_call.1} parent=15 // pred_check_branch
          %167 = sbr.rel (%p165) target = $region20
        $region19: #{tpu_custom_call.1} parent=15 // pred_region
          %s168 = sand.u32 %s46, 1
          %s169 = scalar_lea.sflag [#allocation3], %s168
          %s170 = sand.u32 %s46, 1
          %s171 = smul.addr %s170, 8
          %s172 = scalar_lea.vmem [#allocation2], %s171
          %s173 = smul.u32 2, %s30
          %s175 = ssub.s32 128, 128
          %176 = vsyncadd %s169, %s175
          %s177 = smul.addr %s29, 2
          %s178 = sadd.s32 %s173, %s177
          %s179 = smul.addr %s178, 64
          %s180 = scalar_lea.hbm %s0, %s179
          %s182 = sshll.u32 %s172, 4
          %s183 = int_to_ptr.vmem [resolvable:$true] %s182
          %185 = dma.hbm_to_vmem [thread:$0]  %s180, 128, %s183, %s169
        $region20: #{tpu_custom_call.1} parent=15 // pred_fallthru
          _
        // Predicated region
        $region21: #{tpu_custom_call.1} parent=15 // pred_check
          %p186 = pneg %p84
        $region22: #{tpu_custom_call.1} parent=15 // pred_check_branch
          %188 = sbr.rel (%p186) target = $region24
        $region23: #{tpu_custom_call.1} parent=15 // pred_region
          %s189 = sand.u32 %s74, 1
          %s190 = scalar_lea.sflag [#allocation6], %s189
          %s191 = sand.u32 %s74, 1
          %s192 = smul.addr %s191, 8
          %s193 = scalar_lea.vmem [#allocation5], %s192
          %s194 = smul.u32 2, %s30
          %s196 = ssub.s32 128, 128
          %197 = vsyncadd %s190, %s196
          %s198 = smul.addr %s29, 2
          %s199 = sadd.s32 %s194, %s198
          %s200 = smul.addr %s199, 64
          %s201 = scalar_lea.hbm %s1, %s200
          %s203 = sshll.u32 %s193, 4
          %s204 = int_to_ptr.vmem [resolvable:$true] %s203
          %206 = dma.hbm_to_vmem [thread:$0]  %s201, 128, %s204, %s190
        $region24: #{tpu_custom_call.1} parent=15 // pred_fallthru
          _
      $region16: #{tpu_custom_call.1} parent=5 // pred_fallthru
        _
      %p207 = scmp.le.s32.totalorder 1, %s22
      %p208 = scmp.lt.s32.totalorder %s22, 3
      %p209 = pnand %p207, %p208
      %p210 = pneg %p209
      // Predicated region
      $region25: #{tpu_custom_call.1} parent=5 // pred_check
        _
      $region26: #{tpu_custom_call.1} parent=5 // pred_check_branch
        %212 = sbr.rel (%p209) target = $region28
      $region27: #{tpu_custom_call.1} parent=5 // pred_region
        %s213 = ssub.s32 %s22, 1
        %s214 = sand.u32 %s49, 1
        %s215 = scalar_lea.sflag [#allocation3], %s214
        %s216 = sand.u32 %s49, 1
        %s217 = smul.addr %s216, 8
        %s218 = scalar_lea.vmem [#allocation2], %s217
        // Predicated region
        $region29: #{tpu_custom_call.1} parent=27 // pred_check
          %p219 = pneg %p62
        $region30: #{tpu_custom_call.1} parent=27 // pred_check_branch
          %221 = sbr.rel (%p219) target = $region32
        $region31: #{tpu_custom_call.1} parent=27 // pred_region
          %222 = dma.done %s215, 128
        $region32: #{tpu_custom_call.1} parent=27 // pred_fallthru
          _
        %s223 = sand.u32 %s77, 1
        %s224 = scalar_lea.sflag [#allocation6], %s223
        %s225 = sand.u32 %s77, 1
        %s226 = smul.addr %s225, 8
        %s227 = scalar_lea.vmem [#allocation5], %s226
        // Predicated region
        $region33: #{tpu_custom_call.1} parent=27 // pred_check
          %p228 = pneg %p90
        $region34: #{tpu_custom_call.1} parent=27 // pred_check_branch
          %230 = sbr.rel (%p228) target = $region36
        $region35: #{tpu_custom_call.1} parent=27 // pred_region
          %231 = dma.done %s224, 128
        $region36: #{tpu_custom_call.1} parent=27 // pred_fallthru
          _
        %s232 = sand.u32 %s49, 1
        %s233 = scalar_lea.sflag [#allocation3], %s232
        %s234 = sand.u32 %s49, 1
        %s235 = smul.addr %s234, 8
        %s236 = scalar_lea.vmem [#allocation2], %s235
        %p237 = pneg %p62
        %p238 = pneg %p59
        %s239 = sand.u32 %s77, 1
        %s240 = scalar_lea.sflag [#allocation6], %s239
        %s241 = sand.u32 %s77, 1
        %s242 = smul.addr %s241, 8
        %s243 = scalar_lea.vmem [#allocation5], %s242
        %p244 = pneg %p90
        %p245 = pneg %p87
        %p246 = pneg %p118
        %p247 = pneg %p115
        %s248 = sand.u32 %s105, 1
        %s249 = scalar_lea.sflag [#allocation4], %s248
        %s250 = sand.u32 %s105, 1
        %s251 = smul.addr %s250, 8
        %s252 = scalar_lea.vmem [#allocation7], %s251
        %p253 = pneg %p146
        %p254 = pneg %p143
        %s255 = sand.u32 %s133, 1
        %s256 = scalar_lea.sflag [#allocation9], %s255
        %s257 = sand.u32 %s133, 1
        %s258 = smul.addr %s257, 2
        %s259 = scalar_lea.vmem [#allocation8], %s258
        %s260 = smul.u32 2, %s32
        %s261 = smul.u32 2, %s32
        %s262 = smul.u32 2, %s32
        %s263 = smul.u32 2, %s32
        %v264 = vld [vmem:[%s218] sm:$0xff]
        %v266 = vcombine.high %v264, %v264
        %vm268 = vcmask 1043456
        %v269 = vsel %vm268, %v264, 0.0
        %v270 = vrot.slane %v269, 4
        %v271 = vadd.f32 %v269, %v270
        %v272 = vrot.slane %v271, 2
        %v273 = vadd.f32 %v271, %v272
        %v274 = vrot.slane %v273, 1
        %v275 = vadd.f32 %v273, %v274
        %v276 = vsel %vm268, %v266, 0.0
        %v277 = vrot.slane %v276, 4
        %v278 = vadd.f32 %v276, %v277
        %v279 = vrot.slane %v278, 2
        %v280 = vadd.f32 %v278, %v279
        %v281 = vrot.slane %v280, 1
        %v282 = vadd.f32 %v280, %v281
        %v283 = vld [vmem:[%s227] sm:$0xff]
        %v285 = vcombine.high %v283, %v283
        %v287 = vsel %vm268, %v283, 0.0
        %v288 = vrot.slane %v287, 4
        %v289 = vadd.f32 %v287, %v288
        %v290 = vrot.slane %v289, 2
        %v291 = vadd.f32 %v289, %v290
        %v292 = vrot.slane %v291, 1
        %v293 = vadd.f32 %v291, %v292
        %v294 = vsel %vm268, %v285, 0.0
        %v295 = vrot.slane %v294, 4
        %v296 = vadd.f32 %v294, %v295
        %v297 = vrot.slane %v296, 2
        %v298 = vadd.f32 %v296, %v297
        %v299 = vrot.slane %v298, 1
        %v300 = vadd.f32 %v298, %v299
        %v301 = vmul.f32 %v275, %v293
        %v302 = vmul.f32 %v282, %v300
        %v303 = vmul.f32 %v301, 0.0625
        %v304 = vmul.f32 %v302, 0.0625
        %v305 = vxor.u32 %v303, 2147483648
        %v306 = vxor.u32 %v304, 2147483648
        %v307 = vmul.f32 %v305, 1.442695
        %v308 = vpow.pop %v307
        %v309 = vmul.f32 %v306, 1.442695
        %v310 = vpow.pop %v309
        %v311 = vadd.f32 %v308, 1.0
        %v312 = vadd.f32 %v310, 1.0
        %v313 = vrcp.pop %v311
        %v314 = vmul.f32 1.0, %v313
        %v315 = vrcp.pop %v312
        %v316 = vmul.f32 1.0, %v315
        %v319 = vcombine.low %v314, %v316
        %v321 = vunpack.c.l.s4 1966171168
        %v322 = vunpack.c.0.s8 %v321
        %v323 = vlaneseq
        %v324 = vshrl.u32 %v323, 7
        %v325 = vsub.s32 %v322, %v324
        %v326 = vrot.slane %v319, %v325
        %v328 = vunpack.c.l.s4 1966171168
        %v329 = vunpack.c.0.s8 %v328
        %v330 = vlaneseq
        %v331 = vshrl.u32 %v330, 7
        %v332 = vsub.s32 %v329, %v331
        %v333 = vrot.slane %v326, %v332
        %v335 = vlaneseq
        %vm336 = vcmp.ge.s32.totalorder %v335, 0
        %vm337 = vcmp.lt.s32.totalorder %v335, 256
        %vm338 = vmand %vm336, %vm337
        %339 = vst.msk [vmem:[%s259] sm:$0x3] %vm338, %v333
        %v341 = vmul.f32 %v264, %v319
        %342 = vst [vmem:[%s252] sm:$0xff] %v341
        %s343 = sand.u32 %s105, 1
        %s344 = scalar_lea.sflag [#allocation4], %s343
        %s345 = sand.u32 %s105, 1
        %s346 = smul.addr %s345, 8
        %s347 = scalar_lea.vmem [#allocation7], %s346
        %s348 = sand.u32 %s133, 1
        %s349 = scalar_lea.sflag [#allocation9], %s348
        %s350 = sand.u32 %s133, 1
        %s351 = smul.addr %s350, 2
        %s352 = scalar_lea.vmem [#allocation8], %s351
        // Predicated region
        $region37: #{tpu_custom_call.1} parent=27 // pred_check
          %p353 = pneg %p115
        $region38: #{tpu_custom_call.1} parent=27 // pred_check_branch
          %355 = sbr.rel (%p353) target = $region40
        $region39: #{tpu_custom_call.1} parent=27 // pred_region
          %s356 = smul.u32 2, %s32
          %s358 = ssub.s32 128, 128
          %359 = vsyncadd %s344, %s358
          %s360 = smul.addr %s31, 2
          %s361 = sadd.s32 %s356, %s360
          %s362 = smul.addr %s361, 64
          %s363 = scalar_lea.hbm %s2, %s362
          %s365 = sshll.u32 %s347, 4
          %s366 = int_to_ptr.vmem [resolvable:$true] %s365
          %368 = dma.vmem_to_hbm [thread:$0]  %s366, 128, %s363, %s344
        $region40: #{tpu_custom_call.1} parent=27 // pred_fallthru
          _
        // Predicated region
        $region41: #{tpu_custom_call.1} parent=27 // pred_check
          %p369 = pneg %p143
        $region42: #{tpu_custom_call.1} parent=27 // pred_check_branch
          %371 = sbr.rel (%p369) target = $region44
        $region43: #{tpu_custom_call.1} parent=27 // pred_region
          %s372 = smul.u32 2, %s32
          %s374 = ssub.s32 32, 32
          %375 = vsyncadd %s349, %s374
          %s376 = smul.addr %s31, 2
          %s377 = sadd.s32 %s372, %s376
          %s378 = smul.addr %s377, 16
          %s379 = scalar_lea.hbm %s3, %s378
          %s381 = sshll.u32 %s352, 4
          %s382 = int_to_ptr.vmem [resolvable:$true] %s381
          %384 = dma.vmem_to_hbm [thread:$0]  %s382, 32, %s379, %s349
        $region44: #{tpu_custom_call.1} parent=27 // pred_fallthru
          _
      $region28: #{tpu_custom_call.1} parent=5 // pred_fallthru
        _
      %p385 = scmp.le.s32.totalorder 2, %s22
      // Predicated region
      $region45: #{tpu_custom_call.1} parent=5 // pred_check
        %p386 = pneg %p385
      $region46: #{tpu_custom_call.1} parent=5 // pred_check_branch
        %388 = sbr.rel (%p386) target = $region48
      $region47: #{tpu_custom_call.1} parent=5 // pred_region
        %s389 = ssub.s32 %s22, 2
        // Predicated region
        $region49: #{tpu_custom_call.1} parent=47 // pred_check
          %p390 = pneg %p121
        $region50: #{tpu_custom_call.1} parent=47 // pred_check_branch
          %392 = sbr.rel (%p390) target = $region52
        $region51: #{tpu_custom_call.1} parent=47 // pred_region
          %s393 = sand.u32 %s106, 1
          %s394 = scalar_lea.sflag [#allocation4], %s393
          %s395 = sand.u32 %s106, 1
          %s396 = smul.addr %s395, 8
          %s397 = scalar_lea.vmem [#allocation7], %s396
          %398 = dma.done %s394, 128
        $region52: #{tpu_custom_call.1} parent=47 // pred_fallthru
          _
        // Predicated region
        $region53: #{tpu_custom_call.1} parent=47 // pred_check
          %p399 = pneg %p149
        $region54: #{tpu_custom_call.1} parent=47 // pred_check_branch
          %401 = sbr.rel (%p399) target = $region56
        $region55: #{tpu_custom_call.1} parent=47 // pred_region
          %s402 = sand.u32 %s134, 1
          %s403 = scalar_lea.sflag [#allocation9], %s402
          %s404 = sand.u32 %s134, 1
          %s405 = smul.addr %s404, 2
          %s406 = scalar_lea.vmem [#allocation8], %s405
          %407 = dma.done %s403, 32
        $region56: #{tpu_custom_call.1} parent=47 // pred_fallthru
          _
      $region48: #{tpu_custom_call.1} parent=5 // pred_fallthru
        _
    $region6: #{tpu_custom_call.1} parent=1 // loop_footer
      %s26 = sadd.s32 1, %s22
    $region7: #{tpu_custom_call.1} parent=1 // loop_footer_branch
      %21 = sbr.rel target = $region3
    $region8: #{tpu_custom_call.1} parent=1 // loop_exit
      _
    %408 = vsyncpa [#allocation3], 1
    %s409 = scalar_lea.sflag [#allocation3], 1
    %410 = vsyncpa %s409, 1
    %411 = vsyncpa [#allocation6], 1
    %s412 = scalar_lea.sflag [#allocation6], 1
    %413 = vsyncpa %s412, 1
    %414 = vsyncpa [#allocation4], 1
    %s415 = scalar_lea.sflag [#allocation4], 1
    %416 = vsyncpa %s415, 1
    %417 = vsyncpa [#allocation9], 1
    %s418 = scalar_lea.sflag [#allocation9], 1
    %419 = vsyncpa %s418, 1

</llo_original>
